<compile_context>
chip_gen: v7x
topology: tpu7x:2x2x1
jax: 0.10.0
libtpu: 0.0.40
codegen_flags: <defaults>
</compile_context>

<pallas_src>
import math

import jax
import jax.numpy as jnp
from jax.experimental import pallas as pl
from jax.experimental.pallas import tpu as pltpu


def _round_up(x, m):
    return ((x + m - 1) // m) * m


# ---------------------------------------------------------------------------
# Fused Pallas kernel: all cells + head in one body
# ---------------------------------------------------------------------------
def _make_fused_kernel(n_cells):
    def kernel(*refs):
        x_ref = refs[0]
        out_ref = refs[-1]
        p = refs[1:-1]  # w0, b0, w1, b1, ..., w_head_row, b_head(SMEM)

        h = x_ref[...]  # (TB, F0_pad) f32
        for i in range(n_cells):
            w = p[2 * i][...]        # (Fin_pad, Fout_pad) bf16, BN folded in
            b = p[2 * i + 1][...]    # (1, Fout_pad) f32
            # bf16 operands -> MXU native rate; f32 accumulate; bias+ReLU in f32.
            acc = jnp.dot(h.astype(jnp.bfloat16), w,
                          preferred_element_type=jnp.float32)
            h = jnp.maximum(acc + b, 0.0)

        # Head Linear(F, 1) as a VPU/XLU reduction (avoids an N=1 MXU matmul).
        w_head = p[2 * n_cells][...]       # (1, Flast_pad) f32, 0 on padded lanes
        b_head = p[2 * n_cells + 1][0, 0]  # SMEM scalar
        y = jnp.sum(h * w_head, axis=-1, keepdims=True) + b_head  # (TB, 1) f32
        out_ref[...] = y                   # (TB, 1) block: only 4 B/row of HBM writes

    return kernel


# ---------------------------------------------------------------------------
# Parameter construction (mirrors nn.Linear / nn.BatchNorm1d defaults)
# ---------------------------------------------------------------------------
def init_params(key, input_size, cell_output_dims, eps=1e-5):
    """Raw (unfolded) parameters, matching the PyTorch module's structure."""
    cells = []
    fan_in = input_size
    for out_dim in cell_output_dims:
        key, kw, kb = jax.random.split(key, 3)
        bound = 1.0 / math.sqrt(fan_in)
        w = jax.random.uniform(kw, (fan_in, out_dim), jnp.float32, -bound, bound)
        b = jax.random.uniform(kb, (1, out_dim), jnp.float32, -bound, bound)
        gamma = jnp.ones((1, out_dim), jnp.float32)
        beta = jnp.zeros((1, out_dim), jnp.float32)
        running_mean = jnp.zeros((1, out_dim), jnp.float32)
        running_var = jnp.ones((1, out_dim), jnp.float32)
        cells.append((w, b, gamma, beta, running_mean, running_var))
        fan_in = out_dim
    key, kw, kb = jax.random.split(key, 3)
    bound = 1.0 / math.sqrt(fan_in)
    w = jax.random.uniform(kw, (fan_in, 1), jnp.float32, -bound, bound)
    b = jax.random.uniform(kb, (1, 1), jnp.float32, -bound, bound)
    return {"cells": cells, "head": (w, b), "eps": eps, "input_size": input_size}


def fold_and_pad(raw):
    """Fold eval-mode BN into the linears, pad features to 128 lanes, bf16 weights."""
    eps = raw["eps"]
    fin = raw["input_size"]
    fin_pad = _round_up(fin, 128)
    input_pad = fin_pad
    cells = []
    for (w, b, gamma, beta, mean, var) in raw["cells"]:
        scale = gamma / jnp.sqrt(var + eps)        # (1, Fout)
        shift = beta - mean * scale                # (1, Fout)
        w_f = w * scale                            # fold BN into weights (exact)
        b_f = b * scale + shift
        fout = w.shape[1]
        fout_pad = _round_up(fout, 128)
        w_pad = (jnp.zeros((fin_pad, fout_pad), jnp.float32)
                 .at[:fin, :fout].set(w_f)).astype(jnp.bfloat16)
        b_pad = jnp.zeros((1, fout_pad), jnp.float32).at[:, :fout].set(b_f)
        cells.append((w_pad, b_pad))
        fin, fin_pad = fout, fout_pad
    w_h, b_h = raw["head"]                         # (fin, 1), (1, 1)
    w_h_row = jnp.zeros((1, fin_pad), jnp.float32).at[0, :fin].set(w_h[:, 0])
    return {"cells": cells, "head": (w_h_row, b_h), "input_pad": input_pad,
            "input_size": raw["input_size"]}


# ---------------------------------------------------------------------------
# VMEM budget estimate (resident weights + streamed x/out + live activations)
# ---------------------------------------------------------------------------
def _vmem_limit_bytes(tb, fin0_pad, cells):
    wbytes = 0
    for (w, b) in cells:
        wbytes += 2 * w.size * w.dtype.itemsize   # conservative: assume 2 buffers
        wbytes += 2 * b.size * b.dtype.itemsize
    xbytes = 2 * tb * fin0_pad * 4                # double-buffered x stream
    max_f = max([fin0_pad] + [w.shape[1] for (w, _) in cells])
    hbytes = 6 * tb * max_f * 4                   # live f32/bf16 activation slabs
    obytes = 2 * tb * 128 * 4                     # out tile padded to 128 lanes in VMEM
    est = wbytes + xbytes + hbytes + obytes + (8 << 20)
    # Floor above v5e's 16 MiB default scope; cap below v7x's 64 MiB physical.
    return int(min(max(est, 32 << 20), 56 << 20))


# ---------------------------------------------------------------------------
# Forward pass: single fused pallas_call, batch-tiled grid
# ---------------------------------------------------------------------------
def nas_network_forward(folded, x, tb=None):
    B, Fin = x.shape
    assert Fin == folded["input_size"]
    fin_pad = folded["input_pad"]
    cells = folded["cells"]
    w_head, b_head = folded["head"]

    # Batch tile: big tiles amortize per-grid-step overhead / DMA granularity.
    # Sweep tb in {256, 512, 1024, 2048} for large B.
    B8 = _round_up(B, 8)
    if tb is None:
        tb = 512
    tb = min(_round_up(tb, 8), B8)
    # Keep >= 2 grid steps when the batch allows it so the "parallel" axis can
    # actually be sharded across both TensorCores on v7x (no-op on v5e/v6e).
    if B8 <= tb and B8 >= 16:
        tb = _round_up((B8 + 1) // 2, 8)
    B_pad = _round_up(B8, tb)
    x_pad = jnp.zeros((B_pad, fin_pad), jnp.float32).at[:B, :Fin].set(x)

    grid = (B_pad // tb,)
    vmem_limit = _vmem_limit_bytes(tb, fin_pad, cells)

    def _const_spec(shape, pmode):
        # Grid-invariant (weights stay VMEM-resident across batch tiles).
        if pmode is None:
            return pl.BlockSpec(shape, lambda i: (0, 0))
        return pl.BlockSpec(shape, lambda i: (0, 0), pipeline_mode=pmode)

    def _run(weight_pmode):
        in_specs = [pl.BlockSpec((tb, fin_pad), lambda i: (i, 0))]
        args = [x_pad]
        for (w, b) in cells:
            in_specs.append(_const_spec(w.shape, weight_pmode))
            in_specs.append(_const_spec(b.shape, weight_pmode))
            args.extend([w, b])
        in_specs.append(_const_spec(w_head.shape, weight_pmode))
        args.append(w_head)
        # Head bias as an SMEM scalar (avoids a degenerate (1,1) VMEM tile).
        in_specs.append(pl.BlockSpec(memory_space=pltpu.MemorySpace.SMEM))
        args.append(b_head)

        return pl.pallas_call(
            _make_fused_kernel(len(cells)),
            out_shape=jax.ShapeDtypeStruct((B_pad, 1), jnp.float32),
            grid=grid,
            in_specs=in_specs,
            out_specs=pl.BlockSpec((tb, 1), lambda i: (i, 0)),
            compiler_params=pltpu.CompilerParams(
                dimension_semantics=("parallel",),
                vmem_limit_bytes=vmem_limit),
        )(*args)

    try:
        # Constant-index weight blocks don't need double buffering.
        out = _run(pl.Buffered(1))
    except Exception:
        # Older/newer jax without BlockSpec pipeline_mode support: plain specs.
        out = _run(None)

    # (B, 1) -> match torch .squeeze()
    return out[:B, 0]


# ---------------------------------------------------------------------------
# Pure-JAX references
# ---------------------------------------------------------------------------
def nas_network_ref(raw, x):
    """Exact f32 eval-mode reference (mirrors the PyTorch module)."""
    eps = raw["eps"]
    h = x
    for (w, b, gamma, beta, mean, var) in raw["cells"]:
        y = h @ w + b
        y = (y - mean) / jnp.sqrt(var + eps) * gamma + beta
        h = jnp.maximum(y, 0.0)
    w, b = raw["head"]
    return jnp.squeeze(h @ w + b)


def nas_network_ref_bf16(raw, x):
    """Reference that mimics the kernel's bf16-weight / f32-accumulate math."""
    eps = raw["eps"]
    h = x
    for (w, b, gamma, beta, mean, var) in raw["cells"]:
        scale = gamma / jnp.sqrt(var + eps)
        shift = beta - mean * scale
        wf = (w * scale).astype(jnp.bfloat16)
        bf = b * scale + shift
        y = jnp.dot(h.astype(jnp.bfloat16), wf,
                    preferred_element_type=jnp.float32) + bf
        h = jnp.maximum(y, 0.0)
    w, b = raw["head"]
    return jnp.squeeze(h @ w + b)


if __name__ == "__main__":
    key = jax.random.PRNGKey(0)
    kx, kp = jax.random.split(key)

    batch = 32
    input_size = 16
    cell_output_dims = [32, 16]

    x = jax.random.normal(kx, (batch, input_size), jnp.float32)
    raw_params = init_params(kp, input_size, cell_output_dims)
    folded_params = fold_and_pad(raw_params)

    out = nas_network_forward(folded_params, x)
    out = jax.block_until_ready(out)

    ref_q = nas_network_ref_bf16(raw_params, x)   # same quantization as kernel
    ref_f = nas_network_ref(raw_params, x)        # full-f32 module semantics

    assert out.shape == (batch,), out.shape
    assert jnp.allclose(out, ref_q, atol=1e-3, rtol=1e-3), (out, ref_q)
    assert jnp.allclose(out, ref_f, atol=5e-2, rtol=5e-2), (out, ref_f)

    print("KERNEL_OK")
</pallas_src>

<mosaic_0001>
module attributes {stable_mosaic.version = 11 : i64} {
  func.func @kernel(%arg0: i32, %arg1: memref<16x128xf32, #tpu.memory_space<vmem>>, %arg2: memref<128x128xbf16, #tpu.memory_space<vmem>>, %arg3: memref<1x128xf32, #tpu.memory_space<vmem>>, %arg4: memref<128x128xbf16, #tpu.memory_space<vmem>>, %arg5: memref<1x128xf32, #tpu.memory_space<vmem>>, %arg6: memref<1x128xf32, #tpu.memory_space<vmem>>, %arg7: memref<1x1xf32, #tpu.memory_space<smem>>, %arg8: memref<16x1xf32, #tpu.memory_space<vmem>>) attributes {dimension_semantics = [#tpu.dimension_semantics<parallel>], iteration_bounds = array<i64: 2>, scalar_prefetch = 0 : i64, scratch_operands = 0 : i64, tpu.core_type = #tpu.core_type<tc>, window_params = [{transform_indices = @transform_0, window_bounds = array<i64: 16, 128>}, {pipeline_mode = #tpu.pipeline_mode<synchronous>, transform_indices = @transform_1, window_bounds = array<i64: 128, 128>}, {pipeline_mode = #tpu.pipeline_mode<synchronous>, transform_indices = @transform_2, window_bounds = array<i64: 1, 128>}, {pipeline_mode = #tpu.pipeline_mode<synchronous>, transform_indices = @transform_3, window_bounds = array<i64: 128, 128>}, {pipeline_mode = #tpu.pipeline_mode<synchronous>, transform_indices = @transform_4, window_bounds = array<i64: 1, 128>}, {pipeline_mode = #tpu.pipeline_mode<synchronous>, transform_indices = @transform_5, window_bounds = array<i64: 1, 128>}, {transform_indices = @transform_6, window_bounds = array<i64: 1, 1>}, {transform_indices = @transform_7, window_bounds = array<i64: 16, 1>}]} {
    %c0 = arith.constant 0 : index
    %c0_0 = arith.constant 0 : index
    %0 = vector.load %arg1[%c0, %c0_0] : memref<16x128xf32, #tpu.memory_space<vmem>>, vector<16x128xf32>
    %c0_1 = arith.constant 0 : index
    %c0_2 = arith.constant 0 : index
    %1 = vector.load %arg2[%c0_1, %c0_2] : memref<128x128xbf16, #tpu.memory_space<vmem>>, vector<128x128xbf16>
    %c0_3 = arith.constant 0 : index
    %c0_4 = arith.constant 0 : index
    %2 = vector.load %arg3[%c0_3, %c0_4] : memref<1x128xf32, #tpu.memory_space<vmem>>, vector<1x128xf32>
    %3 = arith.truncf %0 : vector<16x128xf32> to vector<16x128xbf16>
    %cst = arith.constant dense<0.000000e+00> : vector<16x128xf32>
    %4 = tpu.matmul %3, %1, %cst {dimension_numbers = #tpu.dot_dimension_numbers<[1], [0], [0], [1], [0, 0, 1, 1], [], []>} : vector<16x128xbf16>, vector<128x128xbf16>, vector<16x128xf32> -> vector<16x128xf32>
    %5 = vector.broadcast %2 : vector<1x128xf32> to vector<16x128xf32>
    %6 = arith.addf %4, %5 : vector<16x128xf32>
    %cst_5 = arith.constant 0.000000e+00 : f32
    %7 = vector.broadcast %cst_5 : f32 to vector<16x128xf32>
    %8 = arith.maximumf %6, %7 : vector<16x128xf32>
    %c0_6 = arith.constant 0 : index
    %c0_7 = arith.constant 0 : index
    %9 = vector.load %arg4[%c0_6, %c0_7] : memref<128x128xbf16, #tpu.memory_space<vmem>>, vector<128x128xbf16>
    %c0_8 = arith.constant 0 : index
    %c0_9 = arith.constant 0 : index
    %10 = vector.load %arg5[%c0_8, %c0_9] : memref<1x128xf32, #tpu.memory_space<vmem>>, vector<1x128xf32>
    %11 = arith.truncf %8 : vector<16x128xf32> to vector<16x128xbf16>
    %cst_10 = arith.constant dense<0.000000e+00> : vector<16x128xf32>
    %12 = tpu.matmul %11, %9, %cst_10 {dimension_numbers = #tpu.dot_dimension_numbers<[1], [0], [0], [1], [0, 0, 1, 1], [], []>} : vector<16x128xbf16>, vector<128x128xbf16>, vector<16x128xf32> -> vector<16x128xf32>
    %13 = vector.broadcast %10 : vector<1x128xf32> to vector<16x128xf32>
    %14 = arith.addf %12, %13 : vector<16x128xf32>
    %cst_11 = arith.constant 0.000000e+00 : f32
    %15 = vector.broadcast %cst_11 : f32 to vector<16x128xf32>
    %16 = arith.maximumf %14, %15 : vector<16x128xf32>
    %c0_12 = arith.constant 0 : index
    %c0_13 = arith.constant 0 : index
    %17 = vector.load %arg6[%c0_12, %c0_13] : memref<1x128xf32, #tpu.memory_space<vmem>>, vector<1x128xf32>
    %c0_14 = arith.constant 0 : index
    %c0_15 = arith.constant 0 : index
    %18 = memref.load %arg7[%c0_14, %c0_15] : memref<1x1xf32, #tpu.memory_space<smem>>
    %19 = vector.broadcast %17 : vector<1x128xf32> to vector<16x128xf32>
    %20 = arith.mulf %16, %19 : vector<16x128xf32>
    %cst_16 = arith.constant dense<0.000000e+00> : vector<16xf32>
    %21 = vector.multi_reduction <add>, %20, %cst_16 [1] : vector<16x128xf32> to vector<16xf32>
    %22 = vector.shape_cast %21 : vector<16xf32> to vector<16x1xf32>
    %23 = vector.broadcast %18 : f32 to vector<16x1xf32>
    %24 = arith.addf %22, %23 : vector<16x1xf32>
    %c0_17 = arith.constant 0 : index
    %c0_18 = arith.constant 0 : index
    %25 = vector.load %arg8[%c0_17, %c0_18] : memref<16x1xf32, #tpu.memory_space<vmem>>, vector<16x1xf32>
    tpu.vector_store %arg8[%c0_17, %c0_18], %24 {strides = array<i32>} : memref<16x1xf32, #tpu.memory_space<vmem>>, vector<16x1xf32>,
    return
  }
  func.func @transform_0(%arg0: i32) -> (i32, i32) {
    %c0_i32 = arith.constant 0 : i32
    %c0_i32_0 = arith.constant 0 : i32
    return %arg0, %c0_i32 : i32, i32
  }
  func.func @transform_1(%arg0: i32) -> (i32, i32) {
    %c0_i32 = arith.constant 0 : i32
    %c0_i32_0 = arith.constant 0 : i32
    %c0_i32_1 = arith.constant 0 : i32
    return %c0_i32, %c0_i32_0 : i32, i32
  }
  func.func @transform_2(%arg0: i32) -> (i32, i32) {
    %c0_i32 = arith.constant 0 : i32
    %c0_i32_0 = arith.constant 0 : i32
    %c0_i32_1 = arith.constant 0 : i32
    return %c0_i32, %c0_i32_0 : i32, i32
  }
  func.func @transform_3(%arg0: i32) -> (i32, i32) {
    %c0_i32 = arith.constant 0 : i32
    %c0_i32_0 = arith.constant 0 : i32
    %c0_i32_1 = arith.constant 0 : i32
    return %c0_i32, %c0_i32_0 : i32, i32
  }
  func.func @transform_4(%arg0: i32) -> (i32, i32) {
    %c0_i32 = arith.constant 0 : i32
    %c0_i32_0 = arith.constant 0 : i32
    %c0_i32_1 = arith.constant 0 : i32
    return %c0_i32, %c0_i32_0 : i32, i32
  }
  func.func @transform_5(%arg0: i32) -> (i32, i32) {
    %c0_i32 = arith.constant 0 : i32
    %c0_i32_0 = arith.constant 0 : i32
    %c0_i32_1 = arith.constant 0 : i32
    return %c0_i32, %c0_i32_0 : i32, i32
  }
  func.func @transform_6(%arg0: i32) -> (i32, i32) {
    %c0_i32 = arith.constant 0 : i32
    %c0_i32_0 = arith.constant 0 : i32
    %c0_i32_1 = arith.constant 0 : i32
    return %c0_i32, %c0_i32_0 : i32, i32
  }
  func.func @transform_7(%arg0: i32) -> (i32, i32) {
    %c0_i32 = arith.constant 0 : i32
    %c0_i32_0 = arith.constant 0 : i32
    return %arg0, %c0_i32 : i32, i32
  }
}

module attributes {stable_mosaic.version = 11 : i64} {
  func.func @kernel(%arg0: i32, %arg1: memref<16x128xf32, #tpu.memory_space<vmem>>, %arg2: memref<128x128xbf16, #tpu.memory_space<vmem>>, %arg3: memref<1x128xf32, #tpu.memory_space<vmem>>, %arg4: memref<128x128xbf16, #tpu.memory_space<vmem>>, %arg5: memref<1x128xf32, #tpu.memory_space<vmem>>, %arg6: memref<1x128xf32, #tpu.memory_space<vmem>>, %arg7: memref<1x1xf32, #tpu.memory_space<smem>>, %arg8: memref<16x1xf32, #tpu.memory_space<vmem>>) attributes {dimension_semantics = [#tpu.dimension_semantics<parallel>], iteration_bounds = array<i64: 2>, scalar_prefetch = 0 : i64, scratch_operands = 0 : i64, tpu.core_type = #tpu.core_type<tc>, window_params = [{transform_indices = @transform_0, window_bounds = array<i64: 16, 128>}, {pipeline_mode = #tpu.pipeline_mode<synchronous>, transform_indices = @transform_1, window_bounds = array<i64: 128, 128>}, {pipeline_mode = #tpu.pipeline_mode<synchronous>, transform_indices = @transform_2, window_bounds = array<i64: 1, 128>}, {pipeline_mode = #tpu.pipeline_mode<synchronous>, transform_indices = @transform_3, window_bounds = array<i64: 128, 128>}, {pipeline_mode = #tpu.pipeline_mode<synchronous>, transform_indices = @transform_4, window_bounds = array<i64: 1, 128>}, {pipeline_mode = #tpu.pipeline_mode<synchronous>, transform_indices = @transform_5, window_bounds = array<i64: 1, 128>}, {transform_indices = @transform_6, window_bounds = array<i64: 1, 1>}, {transform_indices = @transform_7, window_bounds = array<i64: 16, 1>}]} {
    %c0 = arith.constant 0 : index
    %c0_0 = arith.constant 0 : index
    %0 = vector.load %arg1[%c0, %c0_0] : memref<16x128xf32, #tpu.memory_space<vmem>>, vector<16x128xf32>
    %c0_1 = arith.constant 0 : index
    %c0_2 = arith.constant 0 : index
    %1 = vector.load %arg2[%c0_1, %c0_2] : memref<128x128xbf16, #tpu.memory_space<vmem>>, vector<128x128xbf16>
    %c0_3 = arith.constant 0 : index
    %c0_4 = arith.constant 0 : index
    %2 = vector.load %arg3[%c0_3, %c0_4] : memref<1x128xf32, #tpu.memory_space<vmem>>, vector<1x128xf32>
    %3 = arith.truncf %0 : vector<16x128xf32> to vector<16x128xbf16>
    %cst = arith.constant dense<0.000000e+00> : vector<16x128xf32>
    %4 = tpu.matmul %3, %1, %cst {dimension_numbers = #tpu.dot_dimension_numbers<[1], [0], [0], [1], [0, 0, 1, 1], [], []>} : vector<16x128xbf16>, vector<128x128xbf16>, vector<16x128xf32> -> vector<16x128xf32>
    %5 = vector.broadcast %2 : vector<1x128xf32> to vector<16x128xf32>
    %6 = arith.addf %4, %5 : vector<16x128xf32>
    %cst_5 = arith.constant 0.000000e+00 : f32
    %7 = vector.broadcast %cst_5 : f32 to vector<16x128xf32>
    %8 = arith.maximumf %6, %7 : vector<16x128xf32>
    %c0_6 = arith.constant 0 : index
    %c0_7 = arith.constant 0 : index
    %9 = vector.load %arg4[%c0_6, %c0_7] : memref<128x128xbf16, #tpu.memory_space<vmem>>, vector<128x128xbf16>
    %c0_8 = arith.constant 0 : index
    %c0_9 = arith.constant 0 : index
    %10 = vector.load %arg5[%c0_8, %c0_9] : memref<1x128xf32, #tpu.memory_space<vmem>>, vector<1x128xf32>
    %11 = arith.truncf %8 : vector<16x128xf32> to vector<16x128xbf16>
    %cst_10 = arith.constant dense<0.000000e+00> : vector<16x128xf32>
    %12 = tpu.matmul %11, %9, %cst_10 {dimension_numbers = #tpu.dot_dimension_numbers<[1], [0], [0], [1], [0, 0, 1, 1], [], []>} : vector<16x128xbf16>, vector<128x128xbf16>, vector<16x128xf32> -> vector<16x128xf32>
    %13 = vector.broadcast %10 : vector<1x128xf32> to vector<16x128xf32>
    %14 = arith.addf %12, %13 : vector<16x128xf32>
    %cst_11 = arith.constant 0.000000e+00 : f32
    %15 = vector.broadcast %cst_11 : f32 to vector<16x128xf32>
    %16 = arith.maximumf %14, %15 : vector<16x128xf32>
    %c0_12 = arith.constant 0 : index
    %c0_13 = arith.constant 0 : index
    %17 = vector.load %arg6[%c0_12, %c0_13] : memref<1x128xf32, #tpu.memory_space<vmem>>, vector<1x128xf32>
    %c0_14 = arith.constant 0 : index
    %c0_15 = arith.constant 0 : index
    %18 = memref.load %arg7[%c0_14, %c0_15] : memref<1x1xf32, #tpu.memory_space<smem>>
    %19 = vector.broadcast %17 : vector<1x128xf32> to vector<16x128xf32>
    %20 = arith.mulf %16, %19 : vector<16x128xf32>
    %cst_16 = arith.constant dense<0.000000e+00> : vector<16xf32>
    %21 = vector.multi_reduction <add>, %20, %cst_16 [1] : vector<16x128xf32> to vector<16xf32>
    %22 = vector.shape_cast %21 : vector<16xf32> to vector<16x1xf32>
    %23 = vector.broadcast %18 : f32 to vector<16x1xf32>
    %24 = arith.addf %22, %23 : vector<16x1xf32>
    %c0_17 = arith.constant 0 : index
    %c0_18 = arith.constant 0 : index
    %25 = vector.load %arg8[%c0_17, %c0_18] : memref<16x1xf32, #tpu.memory_space<vmem>>, vector<16x1xf32>
    tpu.vector_store %arg8[%c0_17, %c0_18], %24 {strides = array<i32>} : memref<16x1xf32, #tpu.memory_space<vmem>>, vector<16x1xf32>,
    return
  }
  func.func @transform_0(%arg0: i32) -> (i32, i32) {
    %c0_i32 = arith.constant 0 : i32
    %c0_i32_0 = arith.constant 0 : i32
    return %arg0, %c0_i32 : i32, i32
  }
  func.func @transform_1(%arg0: i32) -> (i32, i32) {
    %c0_i32 = arith.constant 0 : i32
    %c0_i32_0 = arith.constant 0 : i32
    %c0_i32_1 = arith.constant 0 : i32
    return %c0_i32, %c0_i32_0 : i32, i32
  }
  func.func @transform_2(%arg0: i32) -> (i32, i32) {
    %c0_i32 = arith.constant 0 : i32
    %c0_i32_0 = arith.constant 0 : i32
    %c0_i32_1 = arith.constant 0 : i32
    return %c0_i32, %c0_i32_0 : i32, i32
  }
  func.func @transform_3(%arg0: i32) -> (i32, i32) {
    %c0_i32 = arith.constant 0 : i32
    %c0_i32_0 = arith.constant 0 : i32
    %c0_i32_1 = arith.constant 0 : i32
    return %c0_i32, %c0_i32_0 : i32, i32
  }
  func.func @transform_4(%arg0: i32) -> (i32, i32) {
    %c0_i32 = arith.constant 0 : i32
    %c0_i32_0 = arith.constant 0 : i32
    %c0_i32_1 = arith.constant 0 : i32
    return %c0_i32, %c0_i32_0 : i32, i32
  }
  func.func @transform_5(%arg0: i32) -> (i32, i32) {
    %c0_i32 = arith.constant 0 : i32
    %c0_i32_0 = arith.constant 0 : i32
    %c0_i32_1 = arith.constant 0 : i32
    return %c0_i32, %c0_i32_0 : i32, i32
  }
  func.func @transform_6(%arg0: i32) -> (i32, i32) {
    %c0_i32 = arith.constant 0 : i32
    %c0_i32_0 = arith.constant 0 : i32
    %c0_i32_1 = arith.constant 0 : i32
    return %c0_i32, %c0_i32_0 : i32, i32
  }
  func.func @transform_7(%arg0: i32) -> (i32, i32) {
    %c0_i32 = arith.constant 0 : i32
    %c0_i32_0 = arith.constant 0 : i32
    return %arg0, %c0_i32 : i32, i32
  }
}

</mosaic_0001>

<llo_original>
// kernel: tpu_custom_call.1
$region0: #{tpu_custom_call.1}
  #allocation0 [shape = 'u32[]', space=smem, size = 0x4, offset = 0x4, fixed_abs, tag = 'smem constant byte address 0x4 - core index']
  #allocation1 [shape = 'u32[144,128]{1,0:T(1,128)}', space=vmem, size = 0x12000, scoped, tag = 'internal scratch']
  #allocation2 [shape = 'f32[1,1]{1,0:T(1,128)S(6)}', space=smem, size = 0x200, scoped, tag = 'scoped memory for tpu_custom_call.1']
  %s0 = inlined_call_operand.hbm [shape: f32[32,128], index: 0, kind: input, shape index: {}]
  %s1 = inlined_call_operand.hbm [shape: bf16[128,128], index: 1, kind: input, shape index: {}]
  %s2 = inlined_call_operand.vmem [shape: f32[1,128], index: 2, kind: input, shape index: {}]
  %s3 = inlined_call_operand.hbm [shape: bf16[128,128], index: 3, kind: input, shape index: {}]
  %s4 = inlined_call_operand.vmem [shape: f32[1,128], index: 4, kind: input, shape index: {}]
  %s5 = inlined_call_operand.vmem [shape: f32[1,128], index: 5, kind: input, shape index: {}]
  %s6 = inlined_call_operand.<no memory space> [shape: f32[1,1], index: 6, kind: input, shape index: {}]
  %s7 = inlined_call_operand.vmem [shape: f32[32,1], index: 7, kind: output, shape index: {}]
  %s8 = sld [smem:[#allocation0]]
  $region73: #{tpu_custom_call.1} parent=0
    _
  %s10 = ssub.s32 1, %s8
  %s11 = scalar_select 0, %s10, %s8
  %12 = sst [smem:[#allocation2]] %s6
  $region1: #{tpu_custom_call.1} parent=0
    #allocation3 [shape = 'u8[16384]{0}', space=vmem, size = 0x4000, scoped, tag = 'input window, operand 0']
    #allocation4 [shape = 's32[2]{0}', space=sflag, size = 0x8, scoped, tag = 'scoped memory for tpu_custom_call.1']
    #allocation5 [shape = 'u8[32768]{0}', space=vmem, size = 0x8000, scoped, tag = 'input window, operand 1, single buffered']
    #allocation6 [shape = 's32[1]{0}', space=sflag, size = 0x4, scoped, tag = 'scoped memory for tpu_custom_call.1']
    #allocation7 [shape = 'u8[32768]{0}', space=vmem, size = 0x8000, scoped, tag = 'input window, operand 3, single buffered']
    %13 = vsyncpa [#allocation4], 0
    %s14 = scalar_lea.sflag [#allocation4], 1
    %15 = vsyncpa %s14, 0
    %16 = vsyncpa [#allocation6], 0
    loop: start=0, step=1, limit=4
    $region2: #{tpu_custom_call.1} parent=1 // loop_pre_header
      _
    $region3: #{tpu_custom_call.1} parent=1 // loop_header
      %s18 = sphi 0, %s22
      %p19 = scmp.ge.s32.totalorder %s18, 4
      %s28 = sphi 0, %s30
      %s31 = sphi 0, %s28
      %s32 = sphi 0, %s31
      %s48 = sphi 0, %s32
      %s52 = sphi 0, %s52
      %s54 = sphi 0, %s52
      %s55 = sphi 0, %s54
      %s69 = sphi 0, %s55
      %s73 = sphi 0, %s73
      %s75 = sphi 0, %s73
      %s76 = sphi 0, %s75
      %s90 = sphi 0, %s76
      %s94 = sphi 0, %s94
      %s96 = sphi 0, %s94
      %s97 = sphi 0, %s96
      %s111 = sphi 0, %s97
      %s115 = sphi 0, %s115
      %s117 = sphi 0, %s115
      %s118 = sphi 0, %s117
      %s132 = sphi 0, %s118
      %s136 = sphi 0, %s136
      %s138 = sphi 0, %s136
      %s139 = sphi 0, %s138
      %s153 = sphi 0, %s139
      %s157 = sphi 0, %s157
      %s159 = sphi 0, %s157
      %s160 = sphi 0, %s159
      %s174 = sphi 0, %s160
      %s180 = sphi 0, %s182
      %s183 = sphi 0, %s180
      %s184 = sphi 0, %s183
      %s200 = sphi 0, %s184
    $region4: #{tpu_custom_call.1} parent=1 // loop_header_branch
      %21 = sbr.rel (%p19) target = $region8
    $region5: #{tpu_custom_call.1} parent=1 // loop_body
      %s23 = ssub.s32 %s18, 1
      %s24 = ssub.s32 %s18, 2
      %s25 = sadd.s32 %s18, 1
      %s26 = ssub.s32 %s18, %s25
      %p27 = scmp.eq.s32.totalorder %s26, 0
      %s29 = sadd.s32 %s28, 1
      %s30 = scalar_select %p27, %s28, %s29
      %p33 = pneg %p27
      %p34 = scmp.eq.s32.totalorder %s18, 1
      %p35 = por %p33, %p34
      %p36 = scmp.ne.s32.totalorder %s28, %s31
      %p37 = scmp.eq.s32.totalorder %s18, 0
      %p38 = por %p36, %p37
      %p39 = scmp.ne.s32.totalorder %s28, %s31
      %p40 = scmp.eq.s32.totalorder %s23, 1
      %p41 = por %p39, %p40
      %p42 = scmp.ne.s32.totalorder %s31, %s32
      %p43 = scmp.eq.s32.totalorder %s23, 0
      %p44 = por %p42, %p43
      %p45 = scmp.ne.s32.totalorder %s31, %s32
      %p46 = scmp.eq.s32.totalorder %s24, 1
      %p47 = por %p45, %p46
      %p49 = scmp.ne.s32.totalorder %s32, %s48
      %p50 = scmp.eq.s32.totalorder %s24, 0
      %p51 = por %p49, %p50
      %s53 = sadd.s32 %s52, 1
      %p56 = scmp.eq.s32.totalorder %s18, 1
      %p57 = scmp.ne.s32.totalorder %s52, %s54
      %p58 = scmp.eq.s32.totalorder %s18, 0
      %p59 = por %p57, %p58
      %p60 = scmp.ne.s32.totalorder %s52, %s54
      %p61 = scmp.eq.s32.totalorder %s23, 1
      %p62 = por %p60, %p61
      %p63 = scmp.ne.s32.totalorder %s54, %s55
      %p64 = scmp.eq.s32.totalorder %s23, 0
      %p65 = por %p63, %p64
      %p66 = scmp.ne.s32.totalorder %s54, %s55
      %p67 = scmp.eq.s32.totalorder %s24, 1
      %p68 = por %p66, %p67
      %p70 = scmp.ne.s32.totalorder %s55, %s69
      %p71 = scmp.eq.s32.totalorder %s24, 0
      %p72 = por %p70, %p71
      %s74 = sadd.s32 %s73, 1
      %p77 = scmp.eq.s32.totalorder %s18, 1
      %p78 = scmp.ne.s32.totalorder %s73, %s75
      %p79 = scmp.eq.s32.totalorder %s18, 0
      %p80 = por %p78, %p79
      %p81 = scmp.ne.s32.totalorder %s73, %s75
      %p82 = scmp.eq.s32.totalorder %s23, 1
      %p83 = por %p81, %p82
      %p84 = scmp.ne.s32.totalorder %s75, %s76
      %p85 = scmp.eq.s32.totalorder %s23, 0
      %p86 = por %p84, %p85
      %p87 = scmp.ne.s32.totalorder %s75, %s76
      %p88 = scmp.eq.s32.totalorder %s24, 1
      %p89 = por %p87, %p88
      %p91 = scmp.ne.s32.totalorder %s76, %s90
      %p92 = scmp.eq.s32.totalorder %s24, 0
      %p93 = por %p91, %p92
      %s95 = sadd.s32 %s94, 1
      %p98 = scmp.eq.s32.totalorder %s18, 1
      %p99 = scmp.ne.s32.totalorder %s94, %s96
      %p100 = scmp.eq.s32.totalorder %s18, 0
      %p101 = por %p99, %p100
      %p102 = scmp.ne.s32.totalorder %s94, %s96
      %p103 = scmp.eq.s32.totalorder %s23, 1
      %p104 = por %p102, %p103
      %p105 = scmp.ne.s32.totalorder %s96, %s97
      %p106 = scmp.eq.s32.totalorder %s23, 0
      %p107 = por %p105, %p106
      %p108 = scmp.ne.s32.totalorder %s96, %s97
      %p109 = scmp.eq.s32.totalorder %s24, 1
      %p110 = por %p108, %p109
      %p112 = scmp.ne.s32.totalorder %s97, %s111
      %p113 = scmp.eq.s32.totalorder %s24, 0
      %p114 = por %p112, %p113
      %s116 = sadd.s32 %s115, 1
      %p119 = scmp.eq.s32.totalorder %s18, 1
      %p120 = scmp.ne.s32.totalorder %s115, %s117
      %p121 = scmp.eq.s32.totalorder %s18, 0
      %p122 = por %p120, %p121
      %p123 = scmp.ne.s32.totalorder %s115, %s117
      %p124 = scmp.eq.s32.totalorder %s23, 1
      %p125 = por %p123, %p124
      %p126 = scmp.ne.s32.totalorder %s117, %s118
      %p127 = scmp.eq.s32.totalorder %s23, 0
      %p128 = por %p126, %p127
      %p129 = scmp.ne.s32.totalorder %s117, %s118
      %p130 = scmp.eq.s32.totalorder %s24, 1
      %p131 = por %p129, %p130
      %p133 = scmp.ne.s32.totalorder %s118, %s132
      %p134 = scmp.eq.s32.totalorder %s24, 0
      %p135 = por %p133, %p134
      %s137 = sadd.s32 %s136, 1
      %p140 = scmp.eq.s32.totalorder %s18, 1
      %p141 = scmp.ne.s32.totalorder %s136, %s138
      %p142 = scmp.eq.s32.totalorder %s18, 0
      %p143 = por %p141, %p142
      %p144 = scmp.ne.s32.totalorder %s136, %s138
      %p145 = scmp.eq.s32.totalorder %s23, 1
      %p146 = por %p144, %p145
      %p147 = scmp.ne.s32.totalorder %s138, %s139
      %p148 = scmp.eq.s32.totalorder %s23, 0
      %p149 = por %p147, %p148
      %p150 = scmp.ne.s32.totalorder %s138, %s139
      %p151 = scmp.eq.s32.totalorder %s24, 1
      %p152 = por %p150, %p151
      %p154 = scmp.ne.s32.totalorder %s139, %s153
      %p155 = scmp.eq.s32.totalorder %s24, 0
      %p156 = por %p154, %p155
      %s158 = sadd.s32 %s157, 1
      %p161 = scmp.eq.s32.totalorder %s18, 1
      %p162 = scmp.ne.s32.totalorder %s157, %s159
      %p163 = scmp.eq.s32.totalorder %s18, 0
      %p164 = por %p162, %p163
      %p165 = scmp.ne.s32.totalorder %s157, %s159
      %p166 = scmp.eq.s32.totalorder %s23, 1
      %p167 = por %p165, %p166
      %p168 = scmp.ne.s32.totalorder %s159, %s160
      %p169 = scmp.eq.s32.totalorder %s23, 0
      %p170 = por %p168, %p169
      %p171 = scmp.ne.s32.totalorder %s159, %s160
      %p172 = scmp.eq.s32.totalorder %s24, 1
      %p173 = por %p171, %p172
      %p175 = scmp.ne.s32.totalorder %s160, %s174
      %p176 = scmp.eq.s32.totalorder %s24, 0
      %p177 = por %p175, %p176
      %s178 = ssub.s32 %s18, %s25
      %p179 = scmp.eq.s32.totalorder %s178, 0
      %s181 = sadd.s32 %s180, 1
      %s182 = scalar_select %p179, %s180, %s181
      %p185 = pneg %p179
      %p186 = scmp.eq.s32.totalorder %s18, 1
      %p187 = por %p185, %p186
      %p188 = scmp.ne.s32.totalorder %s180, %s183
      %p189 = scmp.eq.s32.totalorder %s18, 0
      %p190 = por %p188, %p189
      %p191 = scmp.ne.s32.totalorder %s180, %s183
      %p192 = scmp.eq.s32.totalorder %s23, 1
      %p193 = por %p191, %p192
      %p194 = scmp.ne.s32.totalorder %s183, %s184
      %p195 = scmp.eq.s32.totalorder %s23, 0
      %p196 = por %p194, %p195
      %p197 = scmp.ne.s32.totalorder %s183, %s184
      %p198 = scmp.eq.s32.totalorder %s24, 1
      %p199 = por %p197, %p198
      %p201 = scmp.ne.s32.totalorder %s184, %s200
      %p202 = scmp.eq.s32.totalorder %s24, 0
      %p203 = por %p201, %p202
      %p204 = scmp.le.s32.totalorder 1, %s18
      %p205 = scmp.lt.s32.totalorder %s18, 3
      %p206 = pnand %p204, %p205
      %p207 = pneg %p206
      // Predicated region
      $region9: #{tpu_custom_call.1} parent=5 // pred_check
        _
      $region10: #{tpu_custom_call.1} parent=5 // pred_check_branch
        %209 = sbr.rel (%p206) target = $region12
      $region11: #{tpu_custom_call.1} parent=5 // pred_region
        %s210 = ssub.s32 %s18, 1
        // Predicated region
        $region13: #{tpu_custom_call.1} parent=11 // pred_check
          %p211 = pneg %p65
        $region14: #{tpu_custom_call.1} parent=11 // pred_check_branch
          %213 = sbr.rel (%p211) target = $region16
        $region15: #{tpu_custom_call.1} parent=11 // pred_region
          %s215 = ssub.s32 1024, 1024
          %216 = vsyncadd [#allocation6], %s215
          %s217 = sshll.u32 [#allocation5], 4
          %s218 = int_to_ptr.vmem [resolvable:$true] %s217
          %223 = dma.hbm_to_vmem [thread:$0]  %s1, 1024, %s218, [#allocation6], 64, 64, 4
        $region16: #{tpu_custom_call.1} parent=11 // pred_fallthru
          _
        // Predicated region
        $region17: #{tpu_custom_call.1} parent=11 // pred_check
          %p224 = pneg %p86
        $region18: #{tpu_custom_call.1} parent=11 // pred_check_branch
          %226 = sbr.rel (%p224) target = $region20
        $region19: #{tpu_custom_call.1} parent=11 // pred_region
          _
        $region20: #{tpu_custom_call.1} parent=11 // pred_fallthru
          _
        // Predicated region
        $region21: #{tpu_custom_call.1} parent=11 // pred_check
          %p227 = pneg %p107
        $region22: #{tpu_custom_call.1} parent=11 // pred_check_branch
          %229 = sbr.rel (%p227) target = $region24
        $region23: #{tpu_custom_call.1} parent=11 // pred_region
          %s231 = ssub.s32 1024, 1024
          %232 = vsyncadd [#allocation6], %s231
          %s233 = sshll.u32 [#allocation7], 4
          %s234 = int_to_ptr.vmem [resolvable:$true] %s233
          %239 = dma.hbm_to_vmem [thread:$0]  %s3, 1024, %s234, [#allocation6], 64, 64, 4
        $region24: #{tpu_custom_call.1} parent=11 // pred_fallthru
          _
        // Predicated region
        $region25: #{tpu_custom_call.1} parent=11 // pred_check
          %p240 = pneg %p128
        $region26: #{tpu_custom_call.1} parent=11 // pred_check_branch
          %242 = sbr.rel (%p240) target = $region28
        $region27: #{tpu_custom_call.1} parent=11 // pred_region
          _
        $region28: #{tpu_custom_call.1} parent=11 // pred_fallthru
          _
        // Predicated region
        $region29: #{tpu_custom_call.1} parent=11 // pred_check
          %p243 = pneg %p149
        $region30: #{tpu_custom_call.1} parent=11 // pred_check_branch
          %245 = sbr.rel (%p243) target = $region32
        $region31: #{tpu_custom_call.1} parent=11 // pred_region
          _
        $region32: #{tpu_custom_call.1} parent=11 // pred_fallthru
          _
        // Predicated region
        $region33: #{tpu_custom_call.1} parent=11 // pred_check
          %p246 = pneg %p170
        $region34: #{tpu_custom_call.1} parent=11 // pred_check_branch
          %248 = sbr.rel (%p246) target = $region36
        $region35: #{tpu_custom_call.1} parent=11 // pred_region
          _
        $region36: #{tpu_custom_call.1} parent=11 // pred_fallthru
          _
      $region12: #{tpu_custom_call.1} parent=5 // pred_fallthru
        _
      %p249 = scmp.lt.s32.totalorder %s18, 2
      // Predicated region
      $region37: #{tpu_custom_call.1} parent=5 // pred_check
        %p250 = pneg %p249
      $region38: #{tpu_custom_call.1} parent=5 // pred_check_branch
        %252 = sbr.rel (%p250) target = $region40
      $region39: #{tpu_custom_call.1} parent=5 // pred_region
        // Predicated region
        $region41: #{tpu_custom_call.1} parent=39 // pred_check
          %p253 = pneg %p38
        $region42: #{tpu_custom_call.1} parent=39 // pred_check_branch
          %255 = sbr.rel (%p253) target = $region44
        $region43: #{tpu_custom_call.1} parent=39 // pred_region
          %s256 = sand.u32 %s28, 1
          %s257 = scalar_lea.sflag [#allocation4], %s256
          %s258 = sand.u32 %s28, 1
          %s259 = smul.addr %s258, 16
          %s260 = scalar_lea.vmem [#allocation3], %s259
          %s261 = smul.u32 2, %s18
          %s263 = ssub.s32 256, 256
          %264 = vsyncadd %s257, %s263
          %s265 = smul.addr %s261, 128
          %s266 = scalar_lea.hbm %s0, %s265
          %s267 = sshll.u32 %s260, 4
          %s268 = int_to_ptr.vmem [resolvable:$true] %s267
          %273 = dma.hbm_to_vmem [thread:$0]  %s266, 256, %s268, %s257, 128, 128, 8
        $region44: #{tpu_custom_call.1} parent=39 // pred_fallthru
          _
      $region40: #{tpu_custom_call.1} parent=5 // pred_fallthru
        _
      %p274 = scmp.le.s32.totalorder 1, %s18
      %p275 = scmp.lt.s32.totalorder %s18, 3
      %p276 = pnand %p274, %p275
      %p277 = pneg %p276
      // Predicated region
      $region45: #{tpu_custom_call.1} parent=5 // pred_check
        _
      $region46: #{tpu_custom_call.1} parent=5 // pred_check_branch
        %279 = sbr.rel (%p276) target = $region48
      $region47: #{tpu_custom_call.1} parent=5 // pred_region
        %s280 = ssub.s32 %s18, 1
        %s281 = sand.u32 %s31, 1
        %s282 = scalar_lea.sflag [#allocation4], %s281
        %s283 = sand.u32 %s31, 1
        %s284 = smul.addr %s283, 16
        %s285 = scalar_lea.vmem [#allocation3], %s284
        // Predicated region
        $region49: #{tpu_custom_call.1} parent=47 // pred_check
          %p286 = pneg %p44
        $region50: #{tpu_custom_call.1} parent=47 // pred_check_branch
          %288 = sbr.rel (%p286) target = $region52
        $region51: #{tpu_custom_call.1} parent=47 // pred_region
          %289 = dma.done %s282, 256
        $region52: #{tpu_custom_call.1} parent=47 // pred_fallthru
          _
        // Predicated region
        $region53: #{tpu_custom_call.1} parent=47 // pred_check
          %p290 = pneg %p65
        $region54: #{tpu_custom_call.1} parent=47 // pred_check_branch
          %292 = sbr.rel (%p290) target = $region56
        $region55: #{tpu_custom_call.1} parent=47 // pred_region
          %293 = dma.done [#allocation6], 1024
        $region56: #{tpu_custom_call.1} parent=47 // pred_fallthru
          _
        // Predicated region
        $region57: #{tpu_custom_call.1} parent=47 // pred_check
          %p294 = pneg %p107
        $region58: #{tpu_custom_call.1} parent=47 // pred_check_branch
          %296 = sbr.rel (%p294) target = $region60
        $region59: #{tpu_custom_call.1} parent=47 // pred_region
          %297 = dma.done [#allocation6], 1024
        $region60: #{tpu_custom_call.1} parent=47 // pred_fallthru
          _
        %s298 = sand.u32 %s31, 1
        %s299 = scalar_lea.sflag [#allocation4], %s298
        %s300 = sand.u32 %s31, 1
        %s301 = smul.addr %s300, 16
        %s302 = scalar_lea.vmem [#allocation3], %s301
        %p303 = pneg %p44
        %p304 = pneg %p41
        %p305 = pneg %p65
        %p306 = pneg %p62
        %p307 = pneg %p86
        %p308 = pneg %p83
        %p309 = pneg %p107
        %p310 = pneg %p104
        %p311 = pneg %p128
        %p312 = pneg %p125
        %p313 = pneg %p149
        %p314 = pneg %p146
        %p315 = pneg %p170
        %p316 = pneg %p167
        %p317 = pneg %p196
        %p318 = pneg %p193
        %s319 = smul.u32 2, %s23
        %p320 = scmp.lt.s32.totalorder %s319, 3
        %s321 = scalar_select %p320, %s319, 3
        %s322 = smul.addr %s321, 8
        %s323 = scalar_lea.vmem %s7, %s322
        %s324 = smul.u32 2, %s23
        %s325 = smul.u32 2, %s23
        %p326 = scmp.lt.s32.totalorder %s325, 3
        %s327 = scalar_select %p326, %s325, 3
        %s328 = smul.addr %s327, 8
        %s329 = scalar_lea.vmem %s7, %s328
        %s330 = smul.u32 2, %s23
        %v332 = vld [vmem:[%s285] sm:$0xff]
        %v333 = vld [vmem:[%s285 + $0x8] sm:$0xff]
        %v334 = vld [vmem:[#allocation5] sm:$0xf]
        %v335 = vld [vmem:[#allocation5 + $0x4] sm:$0xf]
        %v336 = vld [vmem:[#allocation5 + $0x8] sm:$0xf]
        %v337 = vld [vmem:[#allocation5 + $0xc] sm:$0xf]
        %v338 = vld [vmem:[#allocation5 + $0x10] sm:$0xf]
        %v339 = vld [vmem:[#allocation5 + $0x14] sm:$0xf]
        %v340 = vld [vmem:[#allocation5 + $0x18] sm:$0xf]
        %v341 = vld [vmem:[#allocation5 + $0x1c] sm:$0xf]
        %v342 = vld [vmem:[#allocation5 + $0x20] sm:$0xf]
        %v343 = vld [vmem:[#allocation5 + $0x24] sm:$0xf]
        %v344 = vld [vmem:[#allocation5 + $0x28] sm:$0xf]
        %v345 = vld [vmem:[#allocation5 + $0x2c] sm:$0xf]
        %v346 = vld [vmem:[#allocation5 + $0x30] sm:$0xf]
        %v347 = vld [vmem:[#allocation5 + $0x34] sm:$0xf]
        %v348 = vld [vmem:[#allocation5 + $0x38] sm:$0xf]
        %v349 = vld [vmem:[#allocation5 + $0x3c] sm:$0xf]
        %v350 = vld [vmem:[%s2] sm:$0x1]
        %v351 = vpack.c.bf16 %v333, %v332
        %v353 = vlaneseq
        %v354 = vshrl.u32 %v353, 7
        %v355 = vsub.s32 0, %v354
        %v356 = vrot.slane %v350, %v355
        %v374 = vunpack.c.l.b16 %v334
        %v375 = vunpack.c.l.b16 %v335
        %v376 = vunpack.c.l.b16 %v336
        %v377 = vunpack.c.l.b16 %v337
        %v378 = vunpack.c.l.b16 %v338
        %v379 = vunpack.c.l.b16 %v339
        %v380 = vunpack.c.l.b16 %v340
        %v381 = vunpack.c.l.b16 %v341
        %v382 = vunpack.c.l.b16 %v342
        %v383 = vunpack.c.l.b16 %v343
        %v384 = vunpack.c.l.b16 %v344
        %v385 = vunpack.c.l.b16 %v345
        %v386 = vunpack.c.l.b16 %v346
        %v387 = vunpack.c.l.b16 %v347
        %v388 = vunpack.c.l.b16 %v348
        %v389 = vunpack.c.l.b16 %v349
        %v390 = vpack.c.b16 %v375, %v374
        %v391 = vpack.c.b16 %v377, %v376
        %v392 = vpack.c.b16 %v379, %v378
        %v393 = vpack.c.b16 %v381, %v380
        %v394 = vpack.c.b16 %v383, %v382
        %v395 = vpack.c.b16 %v385, %v384
        %v396 = vpack.c.b16 %v387, %v386
        %v397 = vpack.c.b16 %v389, %v388
        %406 = vmatprep.subr.bf16.mxu0 0
        %407 = vmatpush1.bf16.msra.mxu0 %v390
        %408 = vmatprep.subr.bf16.mxu0 0
        %409 = vmatpush1.bf16.msra.mxu0 %v391
        %410 = vmatprep.subr.bf16.mxu0 0
        %411 = vmatpush1.bf16.msra.mxu0 %v392
        %412 = vmatprep.subr.bf16.mxu0 0
        %413 = vmatpush1.bf16.msra.mxu0 %v393
        %414 = vmatprep.subr.bf16.mxu0 0
        %415 = vmatpush1.bf16.msra.mxu0 %v394
        %416 = vmatprep.subr.bf16.mxu0 0
        %417 = vmatpush1.bf16.msra.mxu0 %v395
        %418 = vmatprep.subr.bf16.mxu0 0
        %419 = vmatpush1.bf16.msra.mxu0 %v396
        %420 = vmatprep.subr.bf16.mxu0 0
        %421 = vmatpush1.bf16.msra.mxu0 %v397
        %422 = vmatprep.subr.bf16.mxu0 0
        %423 = vmatpush1.bf16.msra.mxu0 0
        %424 = vmatprep.subr.bf16.mxu0 0
        %425 = vmatpush1.bf16.msra.mxu0 0
        %426 = vmatprep.subr.bf16.mxu0 0
        %427 = vmatpush1.bf16.msra.mxu0 0
        %428 = vmatprep.subr.bf16.mxu0 0
        %429 = vmatpush1.bf16.msra.mxu0 0
        %430 = vmatprep.subr.bf16.mxu0 0
        %431 = vmatpush1.bf16.msra.mxu0 0
        %432 = vmatprep.subr.bf16.mxu0 0
        %433 = vmatpush1.bf16.msra.mxu0 0
        %434 = vmatprep.subr.bf16.mxu0 0
        %435 = vmatpush1.bf16.msra.mxu0 0
        %436 = vmatprep.subr.bf16.mxu0 0
        %437 = vmatpush1.bf16.msra.mxu0 0
        %438 = vmatprep.mubr.bf16.mxu0 0
        %439 = vmatmul.mubr.bf16.gmra.mrb[0].mxu0 %v351
        %v440 = vpop.f32.mrb[0].mxu0
        %v441 = vadd.f32 %v356, %v440
        %v442 = vpop.f32.mrb[0].mxu0
        %v443 = vpop.f32.mrb[0].mxu0
        %v444 = vadd.f32 %v356, %v443
        %v445 = vpop.f32.mrb[0].mxu0
        %446 = vdwg.mxu0
        %v447 = vmax.f32 %v441, 0.0
        %v448 = vmax.f32 %v444, 0.0
        %v449 = vld [vmem:[#allocation7] sm:$0xf]
        %v450 = vld [vmem:[#allocation7 + $0x4] sm:$0xf]
        %v451 = vld [vmem:[#allocation7 + $0x8] sm:$0xf]
        %v452 = vld [vmem:[#allocation7 + $0xc] sm:$0xf]
        %v453 = vld [vmem:[#allocation7 + $0x10] sm:$0xf]
        %v454 = vld [vmem:[#allocation7 + $0x14] sm:$0xf]
        %v455 = vld [vmem:[#allocation7 + $0x18] sm:$0xf]
        %v456 = vld [vmem:[#allocation7 + $0x1c] sm:$0xf]
        %v457 = vld [vmem:[#allocation7 + $0x20] sm:$0xf]
        %v458 = vld [vmem:[#allocation7 + $0x24] sm:$0xf]
        %v459 = vld [vmem:[#allocation7 + $0x28] sm:$0xf]
        %v460 = vld [vmem:[#allocation7 + $0x2c] sm:$0xf]
        %v461 = vld [vmem:[#allocation7 + $0x30] sm:$0xf]
        %v462 = vld [vmem:[#allocation7 + $0x34] sm:$0xf]
        %v463 = vld [vmem:[#allocation7 + $0x38] sm:$0xf]
        %v464 = vld [vmem:[#allocation7 + $0x3c] sm:$0xf]
        %v465 = vld [vmem:[%s4] sm:$0x1]
        %v466 = vpack.c.bf16 %v448, %v447
        %v468 = vlaneseq
        %v469 = vshrl.u32 %v468, 7
        %v470 = vsub.s32 0, %v469
        %v471 = vrot.slane %v465, %v470
        %v489 = vunpack.c.l.b16 %v449
        %v490 = vunpack.c.l.b16 %v450
        %v491 = vunpack.c.l.b16 %v451
        %v492 = vunpack.c.l.b16 %v452
        %v493 = vunpack.c.l.b16 %v453
        %v494 = vunpack.c.l.b16 %v454
        %v495 = vunpack.c.l.b16 %v455
        %v496 = vunpack.c.l.b16 %v456
        %v497 = vunpack.c.l.b16 %v457
        %v498 = vunpack.c.l.b16 %v458
        %v499 = vunpack.c.l.b16 %v459
        %v500 = vunpack.c.l.b16 %v460
        %v501 = vunpack.c.l.b16 %v461
        %v502 = vunpack.c.l.b16 %v462
        %v503 = vunpack.c.l.b16 %v463
        %v504 = vunpack.c.l.b16 %v464
        %v505 = vpack.c.b16 %v490, %v489
        %v506 = vpack.c.b16 %v492, %v491
        %v507 = vpack.c.b16 %v494, %v493
        %v508 = vpack.c.b16 %v496, %v495
        %v509 = vpack.c.b16 %v498, %v497
        %v510 = vpack.c.b16 %v500, %v499
        %v511 = vpack.c.b16 %v502, %v501
        %v512 = vpack.c.b16 %v504, %v503
        %521 = vmatprep.subr.bf16.mxu0 0
        %522 = vmatpush1.bf16.msra.mxu0 %v505
        %523 = vmatprep.subr.bf16.mxu0 0
        %524 = vmatpush1.bf16.msra.mxu0 %v506
        %525 = vmatprep.subr.bf16.mxu0 0
        %526 = vmatpush1.bf16.msra.mxu0 %v507
        %527 = vmatprep.subr.bf16.mxu0 0
        %528 = vmatpush1.bf16.msra.mxu0 %v508
        %529 = vmatprep.subr.bf16.mxu0 0
        %530 = vmatpush1.bf16.msra.mxu0 %v509
        %531 = vmatprep.subr.bf16.mxu0 0
        %532 = vmatpush1.bf16.msra.mxu0 %v510
        %533 = vmatprep.subr.bf16.mxu0 0
        %534 = vmatpush1.bf16.msra.mxu0 %v511
        %535 = vmatprep.subr.bf16.mxu0 0
        %536 = vmatpush1.bf16.msra.mxu0 %v512
        %537 = vmatprep.subr.bf16.mxu0 0
        %538 = vmatpush1.bf16.msra.mxu0 0
        %539 = vmatprep.subr.bf16.mxu0 0
        %540 = vmatpush1.bf16.msra.mxu0 0
        %541 = vmatprep.subr.bf16.mxu0 0
        %542 = vmatpush1.bf16.msra.mxu0 0
        %543 = vmatprep.subr.bf16.mxu0 0
        %544 = vmatpush1.bf16.msra.mxu0 0
        %545 = vmatprep.subr.bf16.mxu0 0
        %546 = vmatpush1.bf16.msra.mxu0 0
        %547 = vmatprep.subr.bf16.mxu0 0
        %548 = vmatpush1.bf16.msra.mxu0 0
        %549 = vmatprep.subr.bf16.mxu0 0
        %550 = vmatpush1.bf16.msra.mxu0 0
        %551 = vmatprep.subr.bf16.mxu0 0
        %552 = vmatpush1.bf16.msra.mxu0 0
        %553 = vmatprep.mubr.bf16.mxu0 0
        %554 = vmatmul.mubr.bf16.gmra.mrb[0].mxu0 %v466
        %v555 = vpop.f32.mrb[0].mxu0
        %v556 = vadd.f32 %v471, %v555
        %v557 = vpop.f32.mrb[0].mxu0
        %v558 = vpop.f32.mrb[0].mxu0
        %v559 = vadd.f32 %v471, %v558
        %v560 = vpop.f32.mrb[0].mxu0
        %561 = vdwg.mxu0
        %v562 = vmax.f32 %v556, 0.0
        %v563 = vmax.f32 %v559, 0.0
        %v564 = vld [vmem:[%s5] sm:$0x1]
        %s565 = sld [smem:[#allocation2]]
        %v567 = vlaneseq
        %v568 = vshrl.u32 %v567, 7
        %v569 = vsub.s32 0, %v568
        %v570 = vrot.slane %v564, %v569
        %v572 = vmul.f32 %v562, %v570
        %v573 = vmul.f32 %v563, %v570
        %574 = vadd.xlane.f32.xlu0 %v572
        %v575 = vpop.xlane.xlu0 %574
        %576 = vadd.xlane.f32.xlu0 %v573
        %v577 = vpop.xlane.xlu0 %576
        %v578 = vstv %s565
        %v579 = vadd.f32 %v575, %v578
        %v580 = vadd.f32 %v577, %v578
        %vm581 = vcmask 7168
        %582 = vst.msk [vmem:[%s329] sm:$0xff] %vm581, %v579
        %583 = vst.msk [vmem:[%s329 + $0x8] sm:$0xff] %vm581, %v580
        %s584 = smul.u32 2, %s23
        %p585 = scmp.lt.s32.totalorder %s584, 3
        %s586 = scalar_select %p585, %s584, 3
        %s587 = smul.addr %s586, 8
        %s588 = scalar_lea.vmem %s7, %s587
        // Predicated region
        $region61: #{tpu_custom_call.1} parent=47 // pred_check
          %p589 = pneg %p193
        $region62: #{tpu_custom_call.1} parent=47 // pred_check_branch
          %591 = sbr.rel (%p589) target = $region64
        $region63: #{tpu_custom_call.1} parent=47 // pred_region
          %s592 = smul.u32 2, %s23
        $region64: #{tpu_custom_call.1} parent=47 // pred_fallthru
          _
      $region48: #{tpu_custom_call.1} parent=5 // pred_fallthru
        _
      %p593 = scmp.le.s32.totalorder 2, %s18
      // Predicated region
      $region65: #{tpu_custom_call.1} parent=5 // pred_check
        %p594 = pneg %p593
      $region66: #{tpu_custom_call.1} parent=5 // pred_check_branch
        %596 = sbr.rel (%p594) target = $region68
      $region67: #{tpu_custom_call.1} parent=5 // pred_region
        %s597 = ssub.s32 %s18, 2
        // Predicated region
        $region69: #{tpu_custom_call.1} parent=67 // pred_check
          %p598 = pneg %p199
        $region70: #{tpu_custom_call.1} parent=67 // pred_check_branch
          %600 = sbr.rel (%p598) target = $region72
        $region71: #{tpu_custom_call.1} parent=67 // pred_region
          %s601 = smul.u32 2, %s24
          %p602 = scmp.lt.s32.totalorder %s601, 3
          %s603 = scalar_select %p602, %s601, 3
          %s604 = smul.addr %s603, 8
          %s605 = scalar_lea.vmem %s7, %s604
        $region72: #{tpu_custom_call.1} parent=67 // pred_fallthru
          _
      $region68: #{tpu_custom_call.1} parent=5 // pred_fallthru
        _
    $region6: #{tpu_custom_call.1} parent=1 // loop_footer
      %s22 = sadd.s32 1, %s18
    $region7: #{tpu_custom_call.1} parent=1 // loop_footer_branch
      %17 = sbr.rel target = $region3
    $region8: #{tpu_custom_call.1} parent=1 // loop_exit
      _
    %606 = vsyncpa [#allocation4], 1
    %s607 = scalar_lea.sflag [#allocation4], 1
    %608 = vsyncpa %s607, 1
    %609 = vsyncpa [#allocation6], 1

// kernel: tpu_custom_call.1
$region0: #{tpu_custom_call.1}
  #allocation0 [shape = 'u32[]', space=smem, size = 0x4, offset = 0x4, fixed_abs, tag = 'smem constant byte address 0x4 - core index']
  #allocation1 [shape = 'u32[144,128]{1,0:T(1,128)}', space=vmem, size = 0x12000, scoped, tag = 'internal scratch']
  #allocation2 [shape = 'f32[1,1]{1,0:T(1,128)S(6)}', space=smem, size = 0x200, scoped, tag = 'scoped memory for tpu_custom_call.1']
  %s0 = inlined_call_operand.hbm [shape: f32[32,128], index: 0, kind: input, shape index: {}]
  %s1 = inlined_call_operand.hbm [shape: bf16[128,128], index: 1, kind: input, shape index: {}]
  %s2 = inlined_call_operand.vmem [shape: f32[1,128], index: 2, kind: input, shape index: {}]
  %s3 = inlined_call_operand.hbm [shape: bf16[128,128], index: 3, kind: input, shape index: {}]
  %s4 = inlined_call_operand.vmem [shape: f32[1,128], index: 4, kind: input, shape index: {}]
  %s5 = inlined_call_operand.vmem [shape: f32[1,128], index: 5, kind: input, shape index: {}]
  %s6 = inlined_call_operand.<no memory space> [shape: f32[1,1], index: 6, kind: input, shape index: {}]
  %s7 = inlined_call_operand.vmem [shape: f32[32,1], index: 7, kind: output, shape index: {}]
  %s8 = sld [smem:[#allocation0]]
  $region73: #{tpu_custom_call.1} parent=0
    _
  %s10 = ssub.s32 1, %s8
  %s11 = scalar_select 0, %s10, %s8
  %12 = sst [smem:[#allocation2]] %s6
  $region1: #{tpu_custom_call.1} parent=0
    #allocation3 [shape = 'u8[16384]{0}', space=vmem, size = 0x4000, scoped, tag = 'input window, operand 0']
    #allocation4 [shape = 's32[2]{0}', space=sflag, size = 0x8, scoped, tag = 'scoped memory for tpu_custom_call.1']
    #allocation5 [shape = 'u8[32768]{0}', space=vmem, size = 0x8000, scoped, tag = 'input window, operand 1, single buffered']
    #allocation6 [shape = 's32[1]{0}', space=sflag, size = 0x4, scoped, tag = 'scoped memory for tpu_custom_call.1']
    #allocation7 [shape = 'u8[32768]{0}', space=vmem, size = 0x8000, scoped, tag = 'input window, operand 3, single buffered']
    %13 = vsyncpa [#allocation4], 0
    %s14 = scalar_lea.sflag [#allocation4], 1
    %15 = vsyncpa %s14, 0
    %16 = vsyncpa [#allocation6], 0
    loop: start=0, step=1, limit=4
    $region2: #{tpu_custom_call.1} parent=1 // loop_pre_header
      _
    $region3: #{tpu_custom_call.1} parent=1 // loop_header
      %s18 = sphi 0, %s22
      %p19 = scmp.ge.s32.totalorder %s18, 4
      %s28 = sphi 0, %s30
      %s31 = sphi 0, %s28
      %s32 = sphi 0, %s31
      %s48 = sphi 0, %s32
      %s52 = sphi 0, %s52
      %s54 = sphi 0, %s52
      %s55 = sphi 0, %s54
      %s69 = sphi 0, %s55
      %s73 = sphi 0, %s73
      %s75 = sphi 0, %s73
      %s76 = sphi 0, %s75
      %s90 = sphi 0, %s76
      %s94 = sphi 0, %s94
      %s96 = sphi 0, %s94
      %s97 = sphi 0, %s96
      %s111 = sphi 0, %s97
      %s115 = sphi 0, %s115
      %s117 = sphi 0, %s115
      %s118 = sphi 0, %s117
      %s132 = sphi 0, %s118
      %s136 = sphi 0, %s136
      %s138 = sphi 0, %s136
      %s139 = sphi 0, %s138
      %s153 = sphi 0, %s139
      %s157 = sphi 0, %s157
      %s159 = sphi 0, %s157
      %s160 = sphi 0, %s159
      %s174 = sphi 0, %s160
      %s180 = sphi 0, %s182
      %s183 = sphi 0, %s180
      %s184 = sphi 0, %s183
      %s200 = sphi 0, %s184
    $region4: #{tpu_custom_call.1} parent=1 // loop_header_branch
      %21 = sbr.rel (%p19) target = $region8
    $region5: #{tpu_custom_call.1} parent=1 // loop_body
      %s23 = ssub.s32 %s18, 1
      %s24 = ssub.s32 %s18, 2
      %s25 = sadd.s32 %s18, 1
      %s26 = ssub.s32 %s18, %s25
      %p27 = scmp.eq.s32.totalorder %s26, 0
      %s29 = sadd.s32 %s28, 1
      %s30 = scalar_select %p27, %s28, %s29
      %p33 = pneg %p27
      %p34 = scmp.eq.s32.totalorder %s18, 1
      %p35 = por %p33, %p34
      %p36 = scmp.ne.s32.totalorder %s28, %s31
      %p37 = scmp.eq.s32.totalorder %s18, 0
      %p38 = por %p36, %p37
      %p39 = scmp.ne.s32.totalorder %s28, %s31
      %p40 = scmp.eq.s32.totalorder %s23, 1
      %p41 = por %p39, %p40
      %p42 = scmp.ne.s32.totalorder %s31, %s32
      %p43 = scmp.eq.s32.totalorder %s23, 0
      %p44 = por %p42, %p43
      %p45 = scmp.ne.s32.totalorder %s31, %s32
      %p46 = scmp.eq.s32.totalorder %s24, 1
      %p47 = por %p45, %p46
      %p49 = scmp.ne.s32.totalorder %s32, %s48
      %p50 = scmp.eq.s32.totalorder %s24, 0
      %p51 = por %p49, %p50
      %s53 = sadd.s32 %s52, 1
      %p56 = scmp.eq.s32.totalorder %s18, 1
      %p57 = scmp.ne.s32.totalorder %s52, %s54
      %p58 = scmp.eq.s32.totalorder %s18, 0
      %p59 = por %p57, %p58
      %p60 = scmp.ne.s32.totalorder %s52, %s54
      %p61 = scmp.eq.s32.totalorder %s23, 1
      %p62 = por %p60, %p61
      %p63 = scmp.ne.s32.totalorder %s54, %s55
      %p64 = scmp.eq.s32.totalorder %s23, 0
      %p65 = por %p63, %p64
      %p66 = scmp.ne.s32.totalorder %s54, %s55
      %p67 = scmp.eq.s32.totalorder %s24, 1
      %p68 = por %p66, %p67
      %p70 = scmp.ne.s32.totalorder %s55, %s69
      %p71 = scmp.eq.s32.totalorder %s24, 0
      %p72 = por %p70, %p71
      %s74 = sadd.s32 %s73, 1
      %p77 = scmp.eq.s32.totalorder %s18, 1
      %p78 = scmp.ne.s32.totalorder %s73, %s75
      %p79 = scmp.eq.s32.totalorder %s18, 0
      %p80 = por %p78, %p79
      %p81 = scmp.ne.s32.totalorder %s73, %s75
      %p82 = scmp.eq.s32.totalorder %s23, 1
      %p83 = por %p81, %p82
      %p84 = scmp.ne.s32.totalorder %s75, %s76
      %p85 = scmp.eq.s32.totalorder %s23, 0
      %p86 = por %p84, %p85
      %p87 = scmp.ne.s32.totalorder %s75, %s76
      %p88 = scmp.eq.s32.totalorder %s24, 1
      %p89 = por %p87, %p88
      %p91 = scmp.ne.s32.totalorder %s76, %s90
      %p92 = scmp.eq.s32.totalorder %s24, 0
      %p93 = por %p91, %p92
      %s95 = sadd.s32 %s94, 1
      %p98 = scmp.eq.s32.totalorder %s18, 1
      %p99 = scmp.ne.s32.totalorder %s94, %s96
      %p100 = scmp.eq.s32.totalorder %s18, 0
      %p101 = por %p99, %p100
      %p102 = scmp.ne.s32.totalorder %s94, %s96
      %p103 = scmp.eq.s32.totalorder %s23, 1
      %p104 = por %p102, %p103
      %p105 = scmp.ne.s32.totalorder %s96, %s97
      %p106 = scmp.eq.s32.totalorder %s23, 0
      %p107 = por %p105, %p106
      %p108 = scmp.ne.s32.totalorder %s96, %s97
      %p109 = scmp.eq.s32.totalorder %s24, 1
      %p110 = por %p108, %p109
      %p112 = scmp.ne.s32.totalorder %s97, %s111
      %p113 = scmp.eq.s32.totalorder %s24, 0
      %p114 = por %p112, %p113
      %s116 = sadd.s32 %s115, 1
      %p119 = scmp.eq.s32.totalorder %s18, 1
      %p120 = scmp.ne.s32.totalorder %s115, %s117
      %p121 = scmp.eq.s32.totalorder %s18, 0
      %p122 = por %p120, %p121
      %p123 = scmp.ne.s32.totalorder %s115, %s117
      %p124 = scmp.eq.s32.totalorder %s23, 1
      %p125 = por %p123, %p124
      %p126 = scmp.ne.s32.totalorder %s117, %s118
      %p127 = scmp.eq.s32.totalorder %s23, 0
      %p128 = por %p126, %p127
      %p129 = scmp.ne.s32.totalorder %s117, %s118
      %p130 = scmp.eq.s32.totalorder %s24, 1
      %p131 = por %p129, %p130
      %p133 = scmp.ne.s32.totalorder %s118, %s132
      %p134 = scmp.eq.s32.totalorder %s24, 0
      %p135 = por %p133, %p134
      %s137 = sadd.s32 %s136, 1
      %p140 = scmp.eq.s32.totalorder %s18, 1
      %p141 = scmp.ne.s32.totalorder %s136, %s138
      %p142 = scmp.eq.s32.totalorder %s18, 0
      %p143 = por %p141, %p142
      %p144 = scmp.ne.s32.totalorder %s136, %s138
      %p145 = scmp.eq.s32.totalorder %s23, 1
      %p146 = por %p144, %p145
      %p147 = scmp.ne.s32.totalorder %s138, %s139
      %p148 = scmp.eq.s32.totalorder %s23, 0
      %p149 = por %p147, %p148
      %p150 = scmp.ne.s32.totalorder %s138, %s139
      %p151 = scmp.eq.s32.totalorder %s24, 1
      %p152 = por %p150, %p151
      %p154 = scmp.ne.s32.totalorder %s139, %s153
      %p155 = scmp.eq.s32.totalorder %s24, 0
      %p156 = por %p154, %p155
      %s158 = sadd.s32 %s157, 1
      %p161 = scmp.eq.s32.totalorder %s18, 1
      %p162 = scmp.ne.s32.totalorder %s157, %s159
      %p163 = scmp.eq.s32.totalorder %s18, 0
      %p164 = por %p162, %p163
      %p165 = scmp.ne.s32.totalorder %s157, %s159
      %p166 = scmp.eq.s32.totalorder %s23, 1
      %p167 = por %p165, %p166
      %p168 = scmp.ne.s32.totalorder %s159, %s160
      %p169 = scmp.eq.s32.totalorder %s23, 0
      %p170 = por %p168, %p169
      %p171 = scmp.ne.s32.totalorder %s159, %s160
      %p172 = scmp.eq.s32.totalorder %s24, 1
      %p173 = por %p171, %p172
      %p175 = scmp.ne.s32.totalorder %s160, %s174
      %p176 = scmp.eq.s32.totalorder %s24, 0
      %p177 = por %p175, %p176
      %s178 = ssub.s32 %s18, %s25
      %p179 = scmp.eq.s32.totalorder %s178, 0
      %s181 = sadd.s32 %s180, 1
      %s182 = scalar_select %p179, %s180, %s181
      %p185 = pneg %p179
      %p186 = scmp.eq.s32.totalorder %s18, 1
      %p187 = por %p185, %p186
      %p188 = scmp.ne.s32.totalorder %s180, %s183
      %p189 = scmp.eq.s32.totalorder %s18, 0
      %p190 = por %p188, %p189
      %p191 = scmp.ne.s32.totalorder %s180, %s183
      %p192 = scmp.eq.s32.totalorder %s23, 1
      %p193 = por %p191, %p192
      %p194 = scmp.ne.s32.totalorder %s183, %s184
      %p195 = scmp.eq.s32.totalorder %s23, 0
      %p196 = por %p194, %p195
      %p197 = scmp.ne.s32.totalorder %s183, %s184
      %p198 = scmp.eq.s32.totalorder %s24, 1
      %p199 = por %p197, %p198
      %p201 = scmp.ne.s32.totalorder %s184, %s200
      %p202 = scmp.eq.s32.totalorder %s24, 0
      %p203 = por %p201, %p202
      %p204 = scmp.le.s32.totalorder 1, %s18
      %p205 = scmp.lt.s32.totalorder %s18, 3
      %p206 = pnand %p204, %p205
      %p207 = pneg %p206
      // Predicated region
      $region9: #{tpu_custom_call.1} parent=5 // pred_check
        _
      $region10: #{tpu_custom_call.1} parent=5 // pred_check_branch
        %209 = sbr.rel (%p206) target = $region12
      $region11: #{tpu_custom_call.1} parent=5 // pred_region
        %s210 = ssub.s32 %s18, 1
        // Predicated region
        $region13: #{tpu_custom_call.1} parent=11 // pred_check
          %p211 = pneg %p65
        $region14: #{tpu_custom_call.1} parent=11 // pred_check_branch
          %213 = sbr.rel (%p211) target = $region16
        $region15: #{tpu_custom_call.1} parent=11 // pred_region
          %s215 = ssub.s32 1024, 1024
          %216 = vsyncadd [#allocation6], %s215
          %s217 = sshll.u32 [#allocation5], 4
          %s218 = int_to_ptr.vmem [resolvable:$true] %s217
          %223 = dma.hbm_to_vmem [thread:$0]  %s1, 1024, %s218, [#allocation6], 64, 64, 4
        $region16: #{tpu_custom_call.1} parent=11 // pred_fallthru
          _
        // Predicated region
        $region17: #{tpu_custom_call.1} parent=11 // pred_check
          %p224 = pneg %p86
        $region18: #{tpu_custom_call.1} parent=11 // pred_check_branch
          %226 = sbr.rel (%p224) target = $region20
        $region19: #{tpu_custom_call.1} parent=11 // pred_region
          _
        $region20: #{tpu_custom_call.1} parent=11 // pred_fallthru
          _
        // Predicated region
        $region21: #{tpu_custom_call.1} parent=11 // pred_check
          %p227 = pneg %p107
        $region22: #{tpu_custom_call.1} parent=11 // pred_check_branch
          %229 = sbr.rel (%p227) target = $region24
        $region23: #{tpu_custom_call.1} parent=11 // pred_region
          %s231 = ssub.s32 1024, 1024
          %232 = vsyncadd [#allocation6], %s231
          %s233 = sshll.u32 [#allocation7], 4
          %s234 = int_to_ptr.vmem [resolvable:$true] %s233
          %239 = dma.hbm_to_vmem [thread:$0]  %s3, 1024, %s234, [#allocation6], 64, 64, 4
        $region24: #{tpu_custom_call.1} parent=11 // pred_fallthru
          _
        // Predicated region
        $region25: #{tpu_custom_call.1} parent=11 // pred_check
          %p240 = pneg %p128
        $region26: #{tpu_custom_call.1} parent=11 // pred_check_branch
          %242 = sbr.rel (%p240) target = $region28
        $region27: #{tpu_custom_call.1} parent=11 // pred_region
          _
        $region28: #{tpu_custom_call.1} parent=11 // pred_fallthru
          _
        // Predicated region
        $region29: #{tpu_custom_call.1} parent=11 // pred_check
          %p243 = pneg %p149
        $region30: #{tpu_custom_call.1} parent=11 // pred_check_branch
          %245 = sbr.rel (%p243) target = $region32
        $region31: #{tpu_custom_call.1} parent=11 // pred_region
          _
        $region32: #{tpu_custom_call.1} parent=11 // pred_fallthru
          _
        // Predicated region
        $region33: #{tpu_custom_call.1} parent=11 // pred_check
          %p246 = pneg %p170
        $region34: #{tpu_custom_call.1} parent=11 // pred_check_branch
          %248 = sbr.rel (%p246) target = $region36
        $region35: #{tpu_custom_call.1} parent=11 // pred_region
          _
        $region36: #{tpu_custom_call.1} parent=11 // pred_fallthru
          _
      $region12: #{tpu_custom_call.1} parent=5 // pred_fallthru
        _
      %p249 = scmp.lt.s32.totalorder %s18, 2
      // Predicated region
      $region37: #{tpu_custom_call.1} parent=5 // pred_check
        %p250 = pneg %p249
      $region38: #{tpu_custom_call.1} parent=5 // pred_check_branch
        %252 = sbr.rel (%p250) target = $region40
      $region39: #{tpu_custom_call.1} parent=5 // pred_region
        // Predicated region
        $region41: #{tpu_custom_call.1} parent=39 // pred_check
          %p253 = pneg %p38
        $region42: #{tpu_custom_call.1} parent=39 // pred_check_branch
          %255 = sbr.rel (%p253) target = $region44
        $region43: #{tpu_custom_call.1} parent=39 // pred_region
          %s256 = sand.u32 %s28, 1
          %s257 = scalar_lea.sflag [#allocation4], %s256
          %s258 = sand.u32 %s28, 1
          %s259 = smul.addr %s258, 16
          %s260 = scalar_lea.vmem [#allocation3], %s259
          %s261 = smul.u32 2, %s18
          %s263 = ssub.s32 256, 256
          %264 = vsyncadd %s257, %s263
          %s265 = smul.addr %s261, 128
          %s266 = scalar_lea.hbm %s0, %s265
          %s267 = sshll.u32 %s260, 4
          %s268 = int_to_ptr.vmem [resolvable:$true] %s267
          %273 = dma.hbm_to_vmem [thread:$0]  %s266, 256, %s268, %s257, 128, 128, 8
        $region44: #{tpu_custom_call.1} parent=39 // pred_fallthru
          _
      $region40: #{tpu_custom_call.1} parent=5 // pred_fallthru
        _
      %p274 = scmp.le.s32.totalorder 1, %s18
      %p275 = scmp.lt.s32.totalorder %s18, 3
      %p276 = pnand %p274, %p275
      %p277 = pneg %p276
      // Predicated region
      $region45: #{tpu_custom_call.1} parent=5 // pred_check
        _
      $region46: #{tpu_custom_call.1} parent=5 // pred_check_branch
        %279 = sbr.rel (%p276) target = $region48
      $region47: #{tpu_custom_call.1} parent=5 // pred_region
        %s280 = ssub.s32 %s18, 1
        %s281 = sand.u32 %s31, 1
        %s282 = scalar_lea.sflag [#allocation4], %s281
        %s283 = sand.u32 %s31, 1
        %s284 = smul.addr %s283, 16
        %s285 = scalar_lea.vmem [#allocation3], %s284
        // Predicated region
        $region49: #{tpu_custom_call.1} parent=47 // pred_check
          %p286 = pneg %p44
        $region50: #{tpu_custom_call.1} parent=47 // pred_check_branch
          %288 = sbr.rel (%p286) target = $region52
        $region51: #{tpu_custom_call.1} parent=47 // pred_region
          %289 = dma.done %s282, 256
        $region52: #{tpu_custom_call.1} parent=47 // pred_fallthru
          _
        // Predicated region
        $region53: #{tpu_custom_call.1} parent=47 // pred_check
          %p290 = pneg %p65
        $region54: #{tpu_custom_call.1} parent=47 // pred_check_branch
          %292 = sbr.rel (%p290) target = $region56
        $region55: #{tpu_custom_call.1} parent=47 // pred_region
          %293 = dma.done [#allocation6], 1024
        $region56: #{tpu_custom_call.1} parent=47 // pred_fallthru
          _
        // Predicated region
        $region57: #{tpu_custom_call.1} parent=47 // pred_check
          %p294 = pneg %p107
        $region58: #{tpu_custom_call.1} parent=47 // pred_check_branch
          %296 = sbr.rel (%p294) target = $region60
        $region59: #{tpu_custom_call.1} parent=47 // pred_region
          %297 = dma.done [#allocation6], 1024
        $region60: #{tpu_custom_call.1} parent=47 // pred_fallthru
          _
        %s298 = sand.u32 %s31, 1
        %s299 = scalar_lea.sflag [#allocation4], %s298
        %s300 = sand.u32 %s31, 1
        %s301 = smul.addr %s300, 16
        %s302 = scalar_lea.vmem [#allocation3], %s301
        %p303 = pneg %p44
        %p304 = pneg %p41
        %p305 = pneg %p65
        %p306 = pneg %p62
        %p307 = pneg %p86
        %p308 = pneg %p83
        %p309 = pneg %p107
        %p310 = pneg %p104
        %p311 = pneg %p128
        %p312 = pneg %p125
        %p313 = pneg %p149
        %p314 = pneg %p146
        %p315 = pneg %p170
        %p316 = pneg %p167
        %p317 = pneg %p196
        %p318 = pneg %p193
        %s319 = smul.u32 2, %s23
        %p320 = scmp.lt.s32.totalorder %s319, 3
        %s321 = scalar_select %p320, %s319, 3
        %s322 = smul.addr %s321, 8
        %s323 = scalar_lea.vmem %s7, %s322
        %s324 = smul.u32 2, %s23
        %s325 = smul.u32 2, %s23
        %p326 = scmp.lt.s32.totalorder %s325, 3
        %s327 = scalar_select %p326, %s325, 3
        %s328 = smul.addr %s327, 8
        %s329 = scalar_lea.vmem %s7, %s328
        %s330 = smul.u32 2, %s23
        %v332 = vld [vmem:[%s285] sm:$0xff]
        %v333 = vld [vmem:[%s285 + $0x8] sm:$0xff]
        %v334 = vld [vmem:[#allocation5] sm:$0xf]
        %v335 = vld [vmem:[#allocation5 + $0x4] sm:$0xf]
        %v336 = vld [vmem:[#allocation5 + $0x8] sm:$0xf]
        %v337 = vld [vmem:[#allocation5 + $0xc] sm:$0xf]
        %v338 = vld [vmem:[#allocation5 + $0x10] sm:$0xf]
        %v339 = vld [vmem:[#allocation5 + $0x14] sm:$0xf]
        %v340 = vld [vmem:[#allocation5 + $0x18] sm:$0xf]
        %v341 = vld [vmem:[#allocation5 + $0x1c] sm:$0xf]
        %v342 = vld [vmem:[#allocation5 + $0x20] sm:$0xf]
        %v343 = vld [vmem:[#allocation5 + $0x24] sm:$0xf]
        %v344 = vld [vmem:[#allocation5 + $0x28] sm:$0xf]
        %v345 = vld [vmem:[#allocation5 + $0x2c] sm:$0xf]
        %v346 = vld [vmem:[#allocation5 + $0x30] sm:$0xf]
        %v347 = vld [vmem:[#allocation5 + $0x34] sm:$0xf]
        %v348 = vld [vmem:[#allocation5 + $0x38] sm:$0xf]
        %v349 = vld [vmem:[#allocation5 + $0x3c] sm:$0xf]
        %v350 = vld [vmem:[%s2] sm:$0x1]
        %v351 = vpack.c.bf16 %v333, %v332
        %v353 = vlaneseq
        %v354 = vshrl.u32 %v353, 7
        %v355 = vsub.s32 0, %v354
        %v356 = vrot.slane %v350, %v355
        %v374 = vunpack.c.l.b16 %v334
        %v375 = vunpack.c.l.b16 %v335
        %v376 = vunpack.c.l.b16 %v336
        %v377 = vunpack.c.l.b16 %v337
        %v378 = vunpack.c.l.b16 %v338
        %v379 = vunpack.c.l.b16 %v339
        %v380 = vunpack.c.l.b16 %v340
        %v381 = vunpack.c.l.b16 %v341
        %v382 = vunpack.c.l.b16 %v342
        %v383 = vunpack.c.l.b16 %v343
        %v384 = vunpack.c.l.b16 %v344
        %v385 = vunpack.c.l.b16 %v345
        %v386 = vunpack.c.l.b16 %v346
        %v387 = vunpack.c.l.b16 %v347
        %v388 = vunpack.c.l.b16 %v348
        %v389 = vunpack.c.l.b16 %v349
        %v390 = vpack.c.b16 %v375, %v374
        %v391 = vpack.c.b16 %v377, %v376
        %v392 = vpack.c.b16 %v379, %v378
        %v393 = vpack.c.b16 %v381, %v380
        %v394 = vpack.c.b16 %v383, %v382
        %v395 = vpack.c.b16 %v385, %v384
        %v396 = vpack.c.b16 %v387, %v386
        %v397 = vpack.c.b16 %v389, %v388
        %406 = vmatprep.subr.bf16.mxu0 0
        %407 = vmatpush1.bf16.msra.mxu0 %v390
        %408 = vmatprep.subr.bf16.mxu0 0
        %409 = vmatpush1.bf16.msra.mxu0 %v391
        %410 = vmatprep.subr.bf16.mxu0 0
        %411 = vmatpush1.bf16.msra.mxu0 %v392
        %412 = vmatprep.subr.bf16.mxu0 0
        %413 = vmatpush1.bf16.msra.mxu0 %v393
        %414 = vmatprep.subr.bf16.mxu0 0
        %415 = vmatpush1.bf16.msra.mxu0 %v394
        %416 = vmatprep.subr.bf16.mxu0 0
        %417 = vmatpush1.bf16.msra.mxu0 %v395
        %418 = vmatprep.subr.bf16.mxu0 0
        %419 = vmatpush1.bf16.msra.mxu0 %v396
        %420 = vmatprep.subr.bf16.mxu0 0
        %421 = vmatpush1.bf16.msra.mxu0 %v397
        %422 = vmatprep.subr.bf16.mxu0 0
        %423 = vmatpush1.bf16.msra.mxu0 0
        %424 = vmatprep.subr.bf16.mxu0 0
        %425 = vmatpush1.bf16.msra.mxu0 0
        %426 = vmatprep.subr.bf16.mxu0 0
        %427 = vmatpush1.bf16.msra.mxu0 0
        %428 = vmatprep.subr.bf16.mxu0 0
        %429 = vmatpush1.bf16.msra.mxu0 0
        %430 = vmatprep.subr.bf16.mxu0 0
        %431 = vmatpush1.bf16.msra.mxu0 0
        %432 = vmatprep.subr.bf16.mxu0 0
        %433 = vmatpush1.bf16.msra.mxu0 0
        %434 = vmatprep.subr.bf16.mxu0 0
        %435 = vmatpush1.bf16.msra.mxu0 0
        %436 = vmatprep.subr.bf16.mxu0 0
        %437 = vmatpush1.bf16.msra.mxu0 0
        %438 = vmatprep.mubr.bf16.mxu0 0
        %439 = vmatmul.mubr.bf16.gmra.mrb[0].mxu0 %v351
        %v440 = vpop.f32.mrb[0].mxu0
        %v441 = vadd.f32 %v356, %v440
        %v442 = vpop.f32.mrb[0].mxu0
        %v443 = vpop.f32.mrb[0].mxu0
        %v444 = vadd.f32 %v356, %v443
        %v445 = vpop.f32.mrb[0].mxu0
        %446 = vdwg.mxu0
        %v447 = vmax.f32 %v441, 0.0
        %v448 = vmax.f32 %v444, 0.0
        %v449 = vld [vmem:[#allocation7] sm:$0xf]
        %v450 = vld [vmem:[#allocation7 + $0x4] sm:$0xf]
        %v451 = vld [vmem:[#allocation7 + $0x8] sm:$0xf]
        %v452 = vld [vmem:[#allocation7 + $0xc] sm:$0xf]
        %v453 = vld [vmem:[#allocation7 + $0x10] sm:$0xf]
        %v454 = vld [vmem:[#allocation7 + $0x14] sm:$0xf]
        %v455 = vld [vmem:[#allocation7 + $0x18] sm:$0xf]
        %v456 = vld [vmem:[#allocation7 + $0x1c] sm:$0xf]
        %v457 = vld [vmem:[#allocation7 + $0x20] sm:$0xf]
        %v458 = vld [vmem:[#allocation7 + $0x24] sm:$0xf]
        %v459 = vld [vmem:[#allocation7 + $0x28] sm:$0xf]
        %v460 = vld [vmem:[#allocation7 + $0x2c] sm:$0xf]
        %v461 = vld [vmem:[#allocation7 + $0x30] sm:$0xf]
        %v462 = vld [vmem:[#allocation7 + $0x34] sm:$0xf]
        %v463 = vld [vmem:[#allocation7 + $0x38] sm:$0xf]
        %v464 = vld [vmem:[#allocation7 + $0x3c] sm:$0xf]
        %v465 = vld [vmem:[%s4] sm:$0x1]
        %v466 = vpack.c.bf16 %v448, %v447
        %v468 = vlaneseq
        %v469 = vshrl.u32 %v468, 7
        %v470 = vsub.s32 0, %v469
        %v471 = vrot.slane %v465, %v470
        %v489 = vunpack.c.l.b16 %v449
        %v490 = vunpack.c.l.b16 %v450
        %v491 = vunpack.c.l.b16 %v451
        %v492 = vunpack.c.l.b16 %v452
        %v493 = vunpack.c.l.b16 %v453
        %v494 = vunpack.c.l.b16 %v454
        %v495 = vunpack.c.l.b16 %v455
        %v496 = vunpack.c.l.b16 %v456
        %v497 = vunpack.c.l.b16 %v457
        %v498 = vunpack.c.l.b16 %v458
        %v499 = vunpack.c.l.b16 %v459
        %v500 = vunpack.c.l.b16 %v460
        %v501 = vunpack.c.l.b16 %v461
        %v502 = vunpack.c.l.b16 %v462
        %v503 = vunpack.c.l.b16 %v463
        %v504 = vunpack.c.l.b16 %v464
        %v505 = vpack.c.b16 %v490, %v489
        %v506 = vpack.c.b16 %v492, %v491
        %v507 = vpack.c.b16 %v494, %v493
        %v508 = vpack.c.b16 %v496, %v495
        %v509 = vpack.c.b16 %v498, %v497
        %v510 = vpack.c.b16 %v500, %v499
        %v511 = vpack.c.b16 %v502, %v501
        %v512 = vpack.c.b16 %v504, %v503
        %521 = vmatprep.subr.bf16.mxu0 0
        %522 = vmatpush1.bf16.msra.mxu0 %v505
        %523 = vmatprep.subr.bf16.mxu0 0
        %524 = vmatpush1.bf16.msra.mxu0 %v506
        %525 = vmatprep.subr.bf16.mxu0 0
        %526 = vmatpush1.bf16.msra.mxu0 %v507
        %527 = vmatprep.subr.bf16.mxu0 0
        %528 = vmatpush1.bf16.msra.mxu0 %v508
        %529 = vmatprep.subr.bf16.mxu0 0
        %530 = vmatpush1.bf16.msra.mxu0 %v509
        %531 = vmatprep.subr.bf16.mxu0 0
        %532 = vmatpush1.bf16.msra.mxu0 %v510
        %533 = vmatprep.subr.bf16.mxu0 0
        %534 = vmatpush1.bf16.msra.mxu0 %v511
        %535 = vmatprep.subr.bf16.mxu0 0
        %536 = vmatpush1.bf16.msra.mxu0 %v512
        %537 = vmatprep.subr.bf16.mxu0 0
        %538 = vmatpush1.bf16.msra.mxu0 0
        %539 = vmatprep.subr.bf16.mxu0 0
        %540 = vmatpush1.bf16.msra.mxu0 0
        %541 = vmatprep.subr.bf16.mxu0 0
        %542 = vmatpush1.bf16.msra.mxu0 0
        %543 = vmatprep.subr.bf16.mxu0 0
        %544 = vmatpush1.bf16.msra.mxu0 0
        %545 = vmatprep.subr.bf16.mxu0 0
        %546 = vmatpush1.bf16.msra.mxu0 0
        %547 = vmatprep.subr.bf16.mxu0 0
        %548 = vmatpush1.bf16.msra.mxu0 0
        %549 = vmatprep.subr.bf16.mxu0 0
        %550 = vmatpush1.bf16.msra.mxu0 0
        %551 = vmatprep.subr.bf16.mxu0 0
        %552 = vmatpush1.bf16.msra.mxu0 0
        %553 = vmatprep.mubr.bf16.mxu0 0
        %554 = vmatmul.mubr.bf16.gmra.mrb[0].mxu0 %v466
        %v555 = vpop.f32.mrb[0].mxu0
        %v556 = vadd.f32 %v471, %v555
        %v557 = vpop.f32.mrb[0].mxu0
        %v558 = vpop.f32.mrb[0].mxu0
        %v559 = vadd.f32 %v471, %v558
        %v560 = vpop.f32.mrb[0].mxu0
        %561 = vdwg.mxu0
        %v562 = vmax.f32 %v556, 0.0
        %v563 = vmax.f32 %v559, 0.0
        %v564 = vld [vmem:[%s5] sm:$0x1]
        %s565 = sld [smem:[#allocation2]]
        %v567 = vlaneseq
        %v568 = vshrl.u32 %v567, 7
        %v569 = vsub.s32 0, %v568
        %v570 = vrot.slane %v564, %v569
        %v572 = vmul.f32 %v562, %v570
        %v573 = vmul.f32 %v563, %v570
        %574 = vadd.xlane.f32.xlu0 %v572
        %v575 = vpop.xlane.xlu0 %574
        %576 = vadd.xlane.f32.xlu0 %v573
        %v577 = vpop.xlane.xlu0 %576
        %v578 = vstv %s565
        %v579 = vadd.f32 %v575, %v578
        %v580 = vadd.f32 %v577, %v578
        %vm581 = vcmask 7168
        %582 = vst.msk [vmem:[%s329] sm:$0xff] %vm581, %v579
        %583 = vst.msk [vmem:[%s329 + $0x8] sm:$0xff] %vm581, %v580
        %s584 = smul.u32 2, %s23
        %p585 = scmp.lt.s32.totalorder %s584, 3
        %s586 = scalar_select %p585, %s584, 3
        %s587 = smul.addr %s586, 8
        %s588 = scalar_lea.vmem %s7, %s587
        // Predicated region
        $region61: #{tpu_custom_call.1} parent=47 // pred_check
          %p589 = pneg %p193
        $region62: #{tpu_custom_call.1} parent=47 // pred_check_branch
          %591 = sbr.rel (%p589) target = $region64
        $region63: #{tpu_custom_call.1} parent=47 // pred_region
          %s592 = smul.u32 2, %s23
        $region64: #{tpu_custom_call.1} parent=47 // pred_fallthru
          _
      $region48: #{tpu_custom_call.1} parent=5 // pred_fallthru
        _
      %p593 = scmp.le.s32.totalorder 2, %s18
      // Predicated region
      $region65: #{tpu_custom_call.1} parent=5 // pred_check
        %p594 = pneg %p593
      $region66: #{tpu_custom_call.1} parent=5 // pred_check_branch
        %596 = sbr.rel (%p594) target = $region68
      $region67: #{tpu_custom_call.1} parent=5 // pred_region
        %s597 = ssub.s32 %s18, 2
        // Predicated region
        $region69: #{tpu_custom_call.1} parent=67 // pred_check
          %p598 = pneg %p199
        $region70: #{tpu_custom_call.1} parent=67 // pred_check_branch
          %600 = sbr.rel (%p598) target = $region72
        $region71: #{tpu_custom_call.1} parent=67 // pred_region
          %s601 = smul.u32 2, %s24
          %p602 = scmp.lt.s32.totalorder %s601, 3
          %s603 = scalar_select %p602, %s601, 3
          %s604 = smul.addr %s603, 8
          %s605 = scalar_lea.vmem %s7, %s604
        $region72: #{tpu_custom_call.1} parent=67 // pred_fallthru
          _
      $region68: #{tpu_custom_call.1} parent=5 // pred_fallthru
        _
    $region6: #{tpu_custom_call.1} parent=1 // loop_footer
      %s22 = sadd.s32 1, %s18
    $region7: #{tpu_custom_call.1} parent=1 // loop_footer_branch
      %17 = sbr.rel target = $region3
    $region8: #{tpu_custom_call.1} parent=1 // loop_exit
      _
    %606 = vsyncpa [#allocation4], 1
    %s607 = scalar_lea.sflag [#allocation4], 1
    %608 = vsyncpa %s607, 1
    %609 = vsyncpa [#allocation6], 1

</llo_original>
